<compile_context>
chip_gen: v5e
topology: v5e:2x2
jax: 0.10.0
libtpu: 0.0.40
codegen_flags: <defaults>
</compile_context>

<pallas_src>
import functools

import jax
import jax.numpy as jnp
from jax.experimental import pallas as pl
from jax.experimental.pallas import tpu as pltpu

_LANE = 128
_SUBLANE = 8


def _round_up(x, m):
    return ((x + m - 1) // m) * m


def _pick_batch_tile(Bp):
    """Pick a batch tile (Bp is already a multiple of 8).

    Prefer >=2 grid programs (v7x megacore sharding + pipelining) but keep tiles
    reasonably large so per-grid-step overhead stays amortized.
    """
    preferred = (2048, 1024, 512, 256, 128)
    for tb in preferred:
        if Bp % tb == 0 and Bp // tb >= 2:
            return tb
    # Small batches: single program covering the whole (padded) batch.
    return Bp


def _qnetwork_kernel(x_ref, w1_ref, b1_ref, w2_ref, b2_ref, w3_ref, b3_ref, o_ref):
    """Fused forward pass for one batch tile. All operands resident in VMEM."""
    x = x_ref[...]

    # fc1 + ReLU  (padded hidden width -> full 128-lane vregs)
    h1 = jnp.dot(x, w1_ref[...], preferred_element_type=jnp.float32) + b1_ref[...]
    h1 = jnp.maximum(h1, 0.0)

    # fc2 + ReLU
    h2 = jnp.dot(h1, w2_ref[...], preferred_element_type=jnp.float32) + b2_ref[...]
    h2 = jnp.maximum(h2, 0.0)

    # fc3 (no activation) -- lane-dense (tb, 128) store, sliced back in the wrapper
    out = jnp.dot(h2, w3_ref[...], preferred_element_type=jnp.float32) + b3_ref[...]
    o_ref[...] = out.astype(o_ref.dtype)


@functools.partial(jax.jit, static_argnames=("batch_tile",))
def qnetwork_forward(state, params, *, batch_tile=None):
    """state: (B, state_size). params: dict of (in,out) weights and (1,out) biases."""
    w1, b1 = params["w1"], params["b1"]
    w2, b2 = params["w2"], params["b2"]
    w3, b3 = params["w3"], params["b3"]

    B, state_size = state.shape
    fc1_units = w1.shape[1]
    fc2_units = w2.shape[1]
    action_size = w3.shape[1]

    # Zero-pad feature dims to full 128-lane width (exact: ReLU(0)=0, zero bias).
    f1p = _round_up(fc1_units, _LANE)
    f2p = _round_up(fc2_units, _LANE)
    ap = _round_up(action_size, _LANE)

    w1p = jnp.pad(w1, ((0, 0), (0, f1p - fc1_units)))
    b1p = jnp.pad(b1, ((0, 0), (0, f1p - fc1_units)))
    w2p = jnp.pad(w2, ((0, f1p - fc1_units), (0, f2p - fc2_units)))
    b2p = jnp.pad(b2, ((0, 0), (0, f2p - fc2_units)))
    w3p = jnp.pad(w3, ((0, f2p - fc2_units), (0, ap - action_size)))
    b3p = jnp.pad(b3, ((0, 0), (0, ap - action_size)))

    # Zero-pad batch to a sublane multiple so tiles are always (8k, ...) aligned.
    Bp = _round_up(B, _SUBLANE)
    x = jnp.pad(state, ((0, Bp - B), (0, 0))) if Bp != B else state

    tb = _pick_batch_tile(Bp) if batch_tile is None else batch_tile
    assert Bp % tb == 0, "padded batch must be divisible by batch_tile"
    grid = (Bp // tb,)

    # Weights/biases are tiny: fully resident in VMEM for every grid step; only the
    # activations (batch-scaled arrays) are tiled along the batch axis.
    full = lambda shape: pl.BlockSpec(shape, lambda i: (0, 0))

    bytes_per = jnp.dtype(jnp.float32).itemsize
    flops = 2 * Bp * (state_size * f1p + f1p * f2p + f2p * ap)
    bytes_accessed = bytes_per * (
        Bp * state_size + Bp * ap
        + state_size * f1p + f1p
        + f1p * f2p + f2p
        + f2p * ap + ap
    )

    out_padded = pl.pallas_call(
        _qnetwork_kernel,
        out_shape=jax.ShapeDtypeStruct((Bp, ap), state.dtype),
        grid_spec=pltpu.PrefetchScalarGridSpec(
            num_scalar_prefetch=0,
            grid=grid,
            in_specs=[
                pl.BlockSpec((tb, state_size), lambda i: (i, 0)),  # x tile
                full((state_size, f1p)),
                full((1, f1p)),
                full((f1p, f2p)),
                full((1, f2p)),
                full((f2p, ap)),
                full((1, ap)),
            ],
            out_specs=pl.BlockSpec((tb, ap), lambda i: (i, 0)),
        ),
        compiler_params=pltpu.CompilerParams(
            dimension_semantics=("parallel",),
        ),
        cost_estimate=pl.CostEstimate(
            flops=int(flops), transcendentals=0, bytes_accessed=int(bytes_accessed)
        ),
    )(x, w1p, b1p, w2p, b2p, w3p, b3p)

    # Slice lane/sublane padding back to the logical (B, action_size) result.
    return out_padded[:B, :action_size]


def init_qnetwork_params(key, state_size, action_size, fc1_units=64, fc2_units=64):
    """Deterministic init mimicking PyTorch nn.Linear default (U[-1/sqrt(fan_in), +])."""
    ks = jax.random.split(key, 6)

    def linear(kw, kb, fan_in, fan_out):
        bound = 1.0 / jnp.sqrt(jnp.float32(fan_in))
        # stored as (in, out) so forward is x @ W + b
        w = jax.random.uniform(kw, (fan_in, fan_out), jnp.float32, -bound, bound)
        b = jax.random.uniform(kb, (1, fan_out), jnp.float32, -bound, bound)
        return w, b

    w1, b1 = linear(ks[0], ks[1], state_size, fc1_units)
    w2, b2 = linear(ks[2], ks[3], fc1_units, fc2_units)
    w3, b3 = linear(ks[4], ks[5], fc2_units, action_size)
    return {"w1": w1, "b1": b1, "w2": w2, "b2": b2, "w3": w3, "b3": b3}


def qnetwork_reference(state, params):
    """Pure-JAX reference for correctness check."""
    h1 = jnp.maximum(state @ params["w1"] + params["b1"], 0.0)
    h2 = jnp.maximum(h1 @ params["w2"] + params["b2"], 0.0)
    return h2 @ params["w3"] + params["b3"]


if __name__ == "__main__":
    key = jax.random.PRNGKey(0)
    k_param, k_s1, k_s2, k_s3 = jax.random.split(key, 4)

    state_size = 8
    action_size = 4
    fc1_units = 64
    fc2_units = 64

    params = init_qnetwork_params(k_param, state_size, action_size, fc1_units, fc2_units)

    # Small batch (single grid step).
    s1 = jax.random.normal(k_s1, (8, state_size), jnp.float32)
    o1 = jax.block_until_ready(qnetwork_forward(s1, params))
    r1 = qnetwork_reference(s1, params)
    assert o1.shape == (8, action_size)
    assert jnp.allclose(o1, r1, atol=1e-5, rtol=1e-5), "mismatch (small batch)"

    # Batch that is not a multiple of 8 (exercises sublane padding path).
    s2 = jax.random.normal(k_s2, (10, state_size), jnp.float32)
    o2 = jax.block_until_ready(qnetwork_forward(s2, params))
    r2 = qnetwork_reference(s2, params)
    assert o2.shape == (10, action_size)
    assert jnp.allclose(o2, r2, atol=1e-5, rtol=1e-5), "mismatch (ragged batch)"

    # Larger batch to exercise batch tiling / pipelining (grid > 1).
    s3 = jax.random.normal(k_s3, (256, state_size), jnp.float32)
    o3 = jax.block_until_ready(qnetwork_forward(s3, params))
    r3 = qnetwork_reference(s3, params)
    assert o3.shape == (256, action_size)
    assert jnp.allclose(o3, r3, atol=1e-5, rtol=1e-5), "mismatch (tiled batch)"

    print("KERNEL_OK")
</pallas_src>

<mosaic_0001>
module attributes {stable_mosaic.version = 11 : i64} {
  func.func @_qnetwork_kernel(%arg0: i32, %arg1: memref<8x8xf32, #tpu.memory_space<vmem>>, %arg2: memref<8x128xf32, #tpu.memory_space<vmem>>, %arg3: memref<1x128xf32, #tpu.memory_space<vmem>>, %arg4: memref<128x128xf32, #tpu.memory_space<vmem>>, %arg5: memref<1x128xf32, #tpu.memory_space<vmem>>, %arg6: memref<128x128xf32, #tpu.memory_space<vmem>>, %arg7: memref<1x128xf32, #tpu.memory_space<vmem>>, %arg8: memref<8x128xf32, #tpu.memory_space<vmem>>) attributes {dimension_semantics = [#tpu.dimension_semantics<parallel>], iteration_bounds = array<i64: 1>, scalar_prefetch = 0 : i64, scratch_operands = 0 : i64, tpu.core_type = #tpu.core_type<tc>, window_params = [{transform_indices = @transform_0, window_bounds = array<i64: 8, 8>}, {pipeline_mode = #tpu.pipeline_mode<synchronous>, transform_indices = @transform_1, window_bounds = array<i64: 8, 128>}, {pipeline_mode = #tpu.pipeline_mode<synchronous>, transform_indices = @transform_2, window_bounds = array<i64: 1, 128>}, {pipeline_mode = #tpu.pipeline_mode<synchronous>, transform_indices = @transform_3, window_bounds = array<i64: 128, 128>}, {pipeline_mode = #tpu.pipeline_mode<synchronous>, transform_indices = @transform_4, window_bounds = array<i64: 1, 128>}, {pipeline_mode = #tpu.pipeline_mode<synchronous>, transform_indices = @transform_5, window_bounds = array<i64: 128, 128>}, {pipeline_mode = #tpu.pipeline_mode<synchronous>, transform_indices = @transform_6, window_bounds = array<i64: 1, 128>}, {transform_indices = @transform_7, window_bounds = array<i64: 8, 128>}]} {
    %c0 = arith.constant 0 : index
    %c0_0 = arith.constant 0 : index
    %0 = vector.load %arg1[%c0, %c0_0] : memref<8x8xf32, #tpu.memory_space<vmem>>, vector<8x8xf32>
    %c0_1 = arith.constant 0 : index
    %c0_2 = arith.constant 0 : index
    %1 = vector.load %arg2[%c0_1, %c0_2] : memref<8x128xf32, #tpu.memory_space<vmem>>, vector<8x128xf32>
    %cst = arith.constant dense<0.000000e+00> : vector<8x128xf32>
    %2 = tpu.matmul %0, %1, %cst {dimension_numbers = #tpu.dot_dimension_numbers<[1], [0], [0], [1], [0, 0, 1, 1], [], []>} : vector<8x8xf32>, vector<8x128xf32>, vector<8x128xf32> -> vector<8x128xf32>
    %c0_3 = arith.constant 0 : index
    %c0_4 = arith.constant 0 : index
    %3 = vector.load %arg3[%c0_3, %c0_4] : memref<1x128xf32, #tpu.memory_space<vmem>>, vector<1x128xf32>
    %4 = vector.broadcast %3 : vector<1x128xf32> to vector<8x128xf32>
    %5 = arith.addf %2, %4 : vector<8x128xf32>
    %cst_5 = arith.constant 0.000000e+00 : f32
    %6 = vector.broadcast %cst_5 : f32 to vector<8x128xf32>
    %7 = arith.maximumf %5, %6 : vector<8x128xf32>
    %c0_6 = arith.constant 0 : index
    %c0_7 = arith.constant 0 : index
    %8 = vector.load %arg4[%c0_6, %c0_7] : memref<128x128xf32, #tpu.memory_space<vmem>>, vector<128x128xf32>
    %cst_8 = arith.constant dense<0.000000e+00> : vector<8x128xf32>
    %9 = tpu.matmul %7, %8, %cst_8 {dimension_numbers = #tpu.dot_dimension_numbers<[1], [0], [0], [1], [0, 0, 1, 1], [], []>} : vector<8x128xf32>, vector<128x128xf32>, vector<8x128xf32> -> vector<8x128xf32>
    %c0_9 = arith.constant 0 : index
    %c0_10 = arith.constant 0 : index
    %10 = vector.load %arg5[%c0_9, %c0_10] : memref<1x128xf32, #tpu.memory_space<vmem>>, vector<1x128xf32>
    %11 = vector.broadcast %10 : vector<1x128xf32> to vector<8x128xf32>
    %12 = arith.addf %9, %11 : vector<8x128xf32>
    %cst_11 = arith.constant 0.000000e+00 : f32
    %13 = vector.broadcast %cst_11 : f32 to vector<8x128xf32>
    %14 = arith.maximumf %12, %13 : vector<8x128xf32>
    %c0_12 = arith.constant 0 : index
    %c0_13 = arith.constant 0 : index
    %15 = vector.load %arg6[%c0_12, %c0_13] : memref<128x128xf32, #tpu.memory_space<vmem>>, vector<128x128xf32>
    %cst_14 = arith.constant dense<0.000000e+00> : vector<8x128xf32>
    %16 = tpu.matmul %14, %15, %cst_14 {dimension_numbers = #tpu.dot_dimension_numbers<[1], [0], [0], [1], [0, 0, 1, 1], [], []>} : vector<8x128xf32>, vector<128x128xf32>, vector<8x128xf32> -> vector<8x128xf32>
    %c0_15 = arith.constant 0 : index
    %c0_16 = arith.constant 0 : index
    %17 = vector.load %arg7[%c0_15, %c0_16] : memref<1x128xf32, #tpu.memory_space<vmem>>, vector<1x128xf32>
    %18 = vector.broadcast %17 : vector<1x128xf32> to vector<8x128xf32>
    %19 = arith.addf %16, %18 : vector<8x128xf32>
    %c0_17 = arith.constant 0 : index
    %c0_18 = arith.constant 0 : index
    %20 = vector.load %arg8[%c0_17, %c0_18] : memref<8x128xf32, #tpu.memory_space<vmem>>, vector<8x128xf32>
    tpu.vector_store %arg8[%c0_17, %c0_18], %19 {strides = array<i32>} : memref<8x128xf32, #tpu.memory_space<vmem>>, vector<8x128xf32>,
    return
  }
  func.func @transform_0(%arg0: i32) -> (i32, i32) {
    %c0_i32 = arith.constant 0 : i32
    %c0_i32_0 = arith.constant 0 : i32
    return %arg0, %c0_i32 : i32, i32
  }
  func.func @transform_1(%arg0: i32) -> (i32, i32) {
    %c0_i32 = arith.constant 0 : i32
    %c0_i32_0 = arith.constant 0 : i32
    %c0_i32_1 = arith.constant 0 : i32
    return %c0_i32, %c0_i32_0 : i32, i32
  }
  func.func @transform_2(%arg0: i32) -> (i32, i32) {
    %c0_i32 = arith.constant 0 : i32
    %c0_i32_0 = arith.constant 0 : i32
    %c0_i32_1 = arith.constant 0 : i32
    return %c0_i32, %c0_i32_0 : i32, i32
  }
  func.func @transform_3(%arg0: i32) -> (i32, i32) {
    %c0_i32 = arith.constant 0 : i32
    %c0_i32_0 = arith.constant 0 : i32
    %c0_i32_1 = arith.constant 0 : i32
    return %c0_i32, %c0_i32_0 : i32, i32
  }
  func.func @transform_4(%arg0: i32) -> (i32, i32) {
    %c0_i32 = arith.constant 0 : i32
    %c0_i32_0 = arith.constant 0 : i32
    %c0_i32_1 = arith.constant 0 : i32
    return %c0_i32, %c0_i32_0 : i32, i32
  }
  func.func @transform_5(%arg0: i32) -> (i32, i32) {
    %c0_i32 = arith.constant 0 : i32
    %c0_i32_0 = arith.constant 0 : i32
    %c0_i32_1 = arith.constant 0 : i32
    return %c0_i32, %c0_i32_0 : i32, i32
  }
  func.func @transform_6(%arg0: i32) -> (i32, i32) {
    %c0_i32 = arith.constant 0 : i32
    %c0_i32_0 = arith.constant 0 : i32
    %c0_i32_1 = arith.constant 0 : i32
    return %c0_i32, %c0_i32_0 : i32, i32
  }
  func.func @transform_7(%arg0: i32) -> (i32, i32) {
    %c0_i32 = arith.constant 0 : i32
    %c0_i32_0 = arith.constant 0 : i32
    return %arg0, %c0_i32 : i32, i32
  }
}

</mosaic_0001>

<llo_original>
// kernel: qnetwork_forward.1
$region0: #{qnetwork_forward.1}
  #allocation0 [shape = 'u32[]', space=smem, size = 0x4, offset = 0x4, fixed_abs, tag = 'smem constant byte address 0x4 - core index']
  #allocation1 [shape = 'u32[72,128]{1,0:T(1,128)}', space=vmem, size = 0x9000, scoped, tag = 'internal scratch']
  %s0 = inlined_call_operand.vmem [shape: f32[8,8], index: 0, kind: input, shape index: {}]
  %s1 = inlined_call_operand.vmem [shape: f32[8,128], index: 1, kind: input, shape index: {}]
  %s2 = inlined_call_operand.vmem [shape: f32[1,128], index: 2, kind: input, shape index: {}]
  %s3 = inlined_call_operand.vmem [shape: f32[128,128], index: 3, kind: input, shape index: {}]
  %s4 = inlined_call_operand.vmem [shape: f32[1,128], index: 4, kind: input, shape index: {}]
  %s5 = inlined_call_operand.vmem [shape: f32[128,128], index: 5, kind: input, shape index: {}]
  %s6 = inlined_call_operand.vmem [shape: f32[1,128], index: 6, kind: input, shape index: {}]
  %s7 = inlined_call_operand.vmem [shape: f32[8,128], index: 7, kind: output, shape index: {}]
  %s8 = sld [smem:[#allocation0]]
  $region38: #{qnetwork_forward.1} parent=0
    _
  %s10 = ssub.s32 1, %s8
  %s11 = scalar_select 0, %s10, %s8
  // Predicated region
  $region2: #{qnetwork_forward.1} parent=0 // pred_check
    _
  $region3: #{qnetwork_forward.1} parent=0 // pred_check_branch
    %13 = sbr.rel (0) target = $region5
  $region4: #{qnetwork_forward.1} parent=0 // pred_region
    _
  $region5: #{qnetwork_forward.1} parent=0 // pred_fallthru
    _
  // Predicated region
  $region6: #{qnetwork_forward.1} parent=0 // pred_check
    _
  $region7: #{qnetwork_forward.1} parent=0 // pred_check_branch
    %15 = sbr.rel (0) target = $region9
  $region8: #{qnetwork_forward.1} parent=0 // pred_region
    _
  $region9: #{qnetwork_forward.1} parent=0 // pred_fallthru
    _
  // Predicated region
  $region10: #{qnetwork_forward.1} parent=0 // pred_check
    _
  $region11: #{qnetwork_forward.1} parent=0 // pred_check_branch
    %17 = sbr.rel (0) target = $region13
  $region12: #{qnetwork_forward.1} parent=0 // pred_region
    _
  $region13: #{qnetwork_forward.1} parent=0 // pred_fallthru
    _
  // Predicated region
  $region14: #{qnetwork_forward.1} parent=0 // pred_check
    _
  $region15: #{qnetwork_forward.1} parent=0 // pred_check_branch
    %19 = sbr.rel (0) target = $region17
  $region16: #{qnetwork_forward.1} parent=0 // pred_region
    _
  $region17: #{qnetwork_forward.1} parent=0 // pred_fallthru
    _
  // Predicated region
  $region18: #{qnetwork_forward.1} parent=0 // pred_check
    _
  $region19: #{qnetwork_forward.1} parent=0 // pred_check_branch
    %21 = sbr.rel (0) target = $region21
  $region20: #{qnetwork_forward.1} parent=0 // pred_region
    _
  $region21: #{qnetwork_forward.1} parent=0 // pred_fallthru
    _
  // Predicated region
  $region22: #{qnetwork_forward.1} parent=0 // pred_check
    _
  $region23: #{qnetwork_forward.1} parent=0 // pred_check_branch
    %23 = sbr.rel (0) target = $region25
  $region24: #{qnetwork_forward.1} parent=0 // pred_region
    _
  $region25: #{qnetwork_forward.1} parent=0 // pred_fallthru
    _
  // Predicated region
  $region26: #{qnetwork_forward.1} parent=0 // pred_check
    _
  $region27: #{qnetwork_forward.1} parent=0 // pred_check_branch
    %25 = sbr.rel (0) target = $region29
  $region28: #{qnetwork_forward.1} parent=0 // pred_region
    _
  $region29: #{qnetwork_forward.1} parent=0 // pred_fallthru
    _
  %v26 = vld [vmem:[%s0] sm:$0xff]
  %v27 = vld [vmem:[%s1] sm:$0xff]
  %v28 = vld [vmem:[%s2] sm:$0x1]
  %v30 = vperm.slane %v28, 0
  %vm32 = vcmask 64512
  %v34 = vsel %vm32, %v26, 0
  %36 = vmatpush.msra.mxu0 0.0
  %37 = vmatpush.msra.mxu0 0.0
  %38 = vmatpush.msra.mxu0 0.0
  %39 = vmatpush.msra.mxu0 0.0
  %40 = vmatpush.msra.mxu0 0.0
  %41 = vmatpush.msra.mxu0 0.0
  %42 = vmatpush.msra.mxu0 0.0
  %43 = vmatpush.msra.mxu0 0.0
  %44 = vmatpush.msra.mxu0 0.0
  %45 = vmatpush.msra.mxu0 0.0
  %46 = vmatpush.msra.mxu0 0.0
  %47 = vmatpush.msra.mxu0 0.0
  %48 = vmatpush.msra.mxu0 0.0
  %49 = vmatpush.msra.mxu0 0.0
  %50 = vmatpush.msra.mxu0 0.0
  %51 = vmatpush.msra.mxu0 %v27
  %52 = vmatmul.f32.gmra.mxu0 %v34
  %v53 = vpop.f32.mrf.mxu0
  %v54 = vadd.f32 %v30, %v53
  %55 = vdwg.mxu0
  %v56 = vmax.f32 %v54, 0.0
  %v57 = vld [vmem:[%s3] sm:$0xff]
  %v58 = vld [vmem:[%s3 + $0x8] sm:$0xff]
  %v59 = vld [vmem:[%s3 + $0x10] sm:$0xff]
  %v60 = vld [vmem:[%s3 + $0x18] sm:$0xff]
  %v61 = vld [vmem:[%s3 + $0x20] sm:$0xff]
  %v62 = vld [vmem:[%s3 + $0x28] sm:$0xff]
  %v63 = vld [vmem:[%s3 + $0x30] sm:$0xff]
  %v64 = vld [vmem:[%s3 + $0x38] sm:$0xff]
  %v65 = vld [vmem:[%s3 + $0x40] sm:$0xff]
  %v66 = vld [vmem:[%s3 + $0x48] sm:$0xff]
  %v67 = vld [vmem:[%s3 + $0x50] sm:$0xff]
  %v68 = vld [vmem:[%s3 + $0x58] sm:$0xff]
  %v69 = vld [vmem:[%s3 + $0x60] sm:$0xff]
  %v70 = vld [vmem:[%s3 + $0x68] sm:$0xff]
  %v71 = vld [vmem:[%s3 + $0x70] sm:$0xff]
  %v72 = vld [vmem:[%s3 + $0x78] sm:$0xff]
  %v73 = vld [vmem:[%s4] sm:$0x1]
  %v75 = vperm.slane %v73, 0
  %77 = vmatpush.msra.mxu0 %v72
  %78 = vmatpush.msra.mxu0 %v71
  %79 = vmatpush.msra.mxu0 %v70
  %80 = vmatpush.msra.mxu0 %v69
  %81 = vmatpush.msra.mxu0 %v68
  %82 = vmatpush.msra.mxu0 %v67
  %83 = vmatpush.msra.mxu0 %v66
  %84 = vmatpush.msra.mxu0 %v65
  %85 = vmatpush.msra.mxu0 %v64
  %86 = vmatpush.msra.mxu0 %v63
  %87 = vmatpush.msra.mxu0 %v62
  %88 = vmatpush.msra.mxu0 %v61
  %89 = vmatpush.msra.mxu0 %v60
  %90 = vmatpush.msra.mxu0 %v59
  %91 = vmatpush.msra.mxu0 %v58
  %92 = vmatpush.msra.mxu0 %v57
  %93 = vmatmul.f32.gmra.mxu0 %v56
  %v94 = vpop.f32.mrf.mxu0
  %v95 = vadd.f32 %v75, %v94
  %96 = vdwg.mxu0
  %v97 = vmax.f32 %v95, 0.0
  %v98 = vld [vmem:[%s5] sm:$0xff]
  %v99 = vld [vmem:[%s5 + $0x8] sm:$0xff]
  %v100 = vld [vmem:[%s5 + $0x10] sm:$0xff]
  %v101 = vld [vmem:[%s5 + $0x18] sm:$0xff]
  %v102 = vld [vmem:[%s5 + $0x20] sm:$0xff]
  %v103 = vld [vmem:[%s5 + $0x28] sm:$0xff]
  %v104 = vld [vmem:[%s5 + $0x30] sm:$0xff]
  %v105 = vld [vmem:[%s5 + $0x38] sm:$0xff]
  %v106 = vld [vmem:[%s5 + $0x40] sm:$0xff]
  %v107 = vld [vmem:[%s5 + $0x48] sm:$0xff]
  %v108 = vld [vmem:[%s5 + $0x50] sm:$0xff]
  %v109 = vld [vmem:[%s5 + $0x58] sm:$0xff]
  %v110 = vld [vmem:[%s5 + $0x60] sm:$0xff]
  %v111 = vld [vmem:[%s5 + $0x68] sm:$0xff]
  %v112 = vld [vmem:[%s5 + $0x70] sm:$0xff]
  %v113 = vld [vmem:[%s5 + $0x78] sm:$0xff]
  %v114 = vld [vmem:[%s6] sm:$0x1]
  %v116 = vperm.slane %v114, 0
  %118 = vmatpush.msra.mxu0 %v113
  %119 = vmatpush.msra.mxu0 %v112
  %120 = vmatpush.msra.mxu0 %v111
  %121 = vmatpush.msra.mxu0 %v110
  %122 = vmatpush.msra.mxu0 %v109
  %123 = vmatpush.msra.mxu0 %v108
  %124 = vmatpush.msra.mxu0 %v107
  %125 = vmatpush.msra.mxu0 %v106
  %126 = vmatpush.msra.mxu0 %v105
  %127 = vmatpush.msra.mxu0 %v104
  %128 = vmatpush.msra.mxu0 %v103
  %129 = vmatpush.msra.mxu0 %v102
  %130 = vmatpush.msra.mxu0 %v101
  %131 = vmatpush.msra.mxu0 %v100
  %132 = vmatpush.msra.mxu0 %v99
  %133 = vmatpush.msra.mxu0 %v98
  %134 = vmatmul.f32.gmra.mxu0 %v97
  %v135 = vpop.f32.mrf.mxu0
  %v136 = vadd.f32 %v116, %v135
  %137 = vdwg.mxu0
  %138 = vst [vmem:[%s7] sm:$0xff] %v136
  // Predicated region
  $region30: #{qnetwork_forward.1} parent=0 // pred_check
    _
  $region31: #{qnetwork_forward.1} parent=0 // pred_check_branch
    %140 = sbr.rel (0) target = $region33
  $region32: #{qnetwork_forward.1} parent=0 // pred_region
    _
  $region33: #{qnetwork_forward.1} parent=0 // pred_fallthru
    _
  // Predicated region
  $region34: #{qnetwork_forward.1} parent=0 // pred_check
    _
  $region35: #{qnetwork_forward.1} parent=0 // pred_check_branch
    %142 = sbr.rel (0) target = $region37
  $region36: #{qnetwork_forward.1} parent=0 // pred_region
    _
  $region37: #{qnetwork_forward.1} parent=0 // pred_fallthru
    _

</llo_original>
